<compile_context>
chip_gen: v5e
topology: v5e:2x2
jax: 0.10.0
libtpu: 0.0.40
codegen_flags: <defaults>
</compile_context>

<pallas_src>
import functools
import math

import jax
import jax.numpy as jnp
from jax import lax
from jax.experimental import pallas as pl
from jax.experimental.pallas import tpu as pltpu

_LANE = 128
_SUBLANE = 8
_INV_SQRT2 = 1.0 / math.sqrt(2.0)


# ----------------------------- kernels --------------------------------------

def _gelu_exact_f32(h):
    # Exact erf GELU (PyTorch nn.GELU() default), computed in f32.
    return 0.5 * h * (1.0 + lax.erf(h * _INV_SQRT2))


def _ffn_kernel_resident(x_ref, w1_ref, b1_ref, w2_ref, b2_ref, o_ref):
    """Weights fully resident in VMEM; one grid step per row tile."""
    h = jnp.dot(x_ref[...], w1_ref[...], preferred_element_type=jnp.float32)
    h = _gelu_exact_f32(h + b1_ref[...].astype(jnp.float32))
    out = jnp.dot(h.astype(w2_ref.dtype), w2_ref[...],
                  preferred_element_type=jnp.float32)
    o_ref[...] = (out + b2_ref[...].astype(jnp.float32)).astype(o_ref.dtype)


def _ffn_kernel_tiled(x_ref, w1_ref, b1_ref, w2_ref, b2_ref, o_ref, acc_ref):
    """Hidden (F) axis tiled on a trailing reduction axis; f32 VMEM accumulator."""
    f = pl.program_id(1)

    @pl.when(f == 0)
    def _init():
        # Fold b2 into the accumulator init (saves a (tm, C) add at the tail).
        acc_ref[...] = jnp.broadcast_to(
            b2_ref[...].astype(jnp.float32), acc_ref.shape)

    h = jnp.dot(x_ref[...], w1_ref[...], preferred_element_type=jnp.float32)
    h = _gelu_exact_f32(h + b1_ref[...].astype(jnp.float32))
    acc_ref[...] += jnp.dot(h.astype(w2_ref.dtype), w2_ref[...],
                            preferred_element_type=jnp.float32)

    @pl.when(f == pl.num_programs(1) - 1)
    def _finalize():
        o_ref[...] = acc_ref[...].astype(o_ref.dtype)


# ------------------------- tile / VMEM planning ------------------------------

def _cdiv(a, b):
    return -(-a // b)


def _round_up(a, b):
    return _cdiv(a, b) * b


def _vmem_capacity_bytes():
    try:
        return int(pltpu.get_tpu_info().vmem_capacity_bytes)
    except Exception:
        return 64 << 20  # conservative (v7x per-core)


def _const_spec(block_shape, index_map):
    """Spec for a block whose index is constant over the grid.

    Pallas fetches it from HBM once; Buffered(1) single-buffers it (halves its
    VMEM footprint).  Falls back to a plain spec if pipeline_mode/Buffered is
    unavailable in this JAX build.
    """
    if hasattr(pl, "Buffered"):
        try:
            return pl.BlockSpec(block_shape, index_map,
                                pipeline_mode=pl.Buffered(1))
        except Exception:
            pass
    return pl.BlockSpec(block_shape, index_map)


def _vmem_bytes_resident(tm, C, F, x_bytes, w_bytes, o_bytes):
    weights = (C * F + F + F * C + C) * w_bytes          # single-buffered
    io = 2 * tm * C * x_bytes + 2 * tm * C * o_bytes     # double-buffered x/out
    inter = tm * F * 4 + tm * F * w_bytes                # f32 hidden + recast
    return weights + io + inter


def _vmem_bytes_tiled(tm, tf, C, x_bytes, w_bytes, o_bytes):
    weights = 2 * ((C * tf + tf) + (tf * C + C)) * w_bytes  # double-buffered
    io = 2 * tm * C * x_bytes + 2 * tm * C * o_bytes
    acc = tm * C * 4
    inter = tm * tf * 4 + tm * tf * w_bytes
    return weights + io + acc + inter


def _largest_lane_divisor(fp, cap):
    """Largest multiple of 128 dividing fp (fp % 128 == 0) that is <= cap."""
    cap = max(_LANE, (min(cap, fp) // _LANE) * _LANE)
    for cand in range(cap, _LANE - 1, -_LANE):
        if fp % cand == 0:
            return cand
    return _LANE


def _pick_row_tile(M, row_tile):
    tm = min(row_tile, M)
    if M >= 512:
        # Megacore load balance (v7x has 2 TCs): ensure >=2 row tiles when M allows.
        tm = min(tm, _round_up(_cdiv(M, 2), _LANE))
    if tm < M and tm % _SUBLANE:
        tm = _round_up(tm, _SUBLANE)
    return min(tm, M)


def _select_config(M, C, F, x_bytes, w_bytes, o_bytes, budget,
                   row_tile, max_f_tile, force_f_tiling):
    """Returns (tm, tf, n_f, resident)."""
    tm = _pick_row_tile(M, row_tile)

    # Path 1: W1/W2 fully resident in VMEM, fetched once for the whole grid.
    if not force_f_tiling:
        cand = tm
        while True:
            if _vmem_bytes_resident(cand, C, F, x_bytes, w_bytes, o_bytes) <= budget:
                return cand, F, 1, True
            if cand <= min(M, 256):
                break
            cand = min(M, max(_SUBLANE, _round_up(_cdiv(cand, 2), _SUBLANE)))

    # Path 2: F tiled on a trailing reduction axis (weights streamed per row tile).
    fp = _round_up(F, _LANE)
    tf = _largest_lane_divisor(fp, max_f_tile)
    while _vmem_bytes_tiled(tm, tf, C, x_bytes, w_bytes, o_bytes) > budget:
        if tf > _LANE:
            tf = _largest_lane_divisor(fp, tf - _LANE)
        elif tm > min(M, 64):
            tm = min(M, max(_SUBLANE, _round_up(_cdiv(tm, 2), _SUBLANE)))
        else:
            break  # best effort; leave the rest to the compiler
    return tm, tf, fp // tf, False


# ------------------------------- wrapper -------------------------------------

@functools.partial(
    jax.jit,
    static_argnames=("row_tile", "max_f_tile", "force_f_tiling",
                     "weight_compute_dtype"))
def position_wise_ffn(x, w1, b1, w2, b2, *, row_tile=None, max_f_tile=4096,
                      force_f_tiling=False, weight_compute_dtype=None):
    """x: [..., C]; w1: [C, F]; b1: [F]; w2: [F, C]; b2: [C]."""
    orig_shape = x.shape
    out_dtype = x.dtype
    C = orig_shape[-1]
    F = w1.shape[1]

    # Optional bf16 compute path for f32 parameters (MXU fast path + half the
    # weight HBM stream on v5e/v6e/v7x); off by default to preserve semantics.
    if weight_compute_dtype is not None:
        cd = jnp.dtype(weight_compute_dtype)
        x, w1, b1, w2, b2 = (a.astype(cd) for a in (x, w1, b1, w2, b2))

    x2d = x.reshape(-1, C)
    M = x2d.shape[0]
    b1_2d = b1.reshape(1, F)
    b2_2d = b2.reshape(1, C)

    x_bytes = jnp.dtype(x.dtype).itemsize
    w_bytes = jnp.dtype(w1.dtype).itemsize
    o_bytes = jnp.dtype(out_dtype).itemsize

    vmem_cap = _vmem_capacity_bytes()
    budget = vmem_cap - (8 << 20)  # headroom for Mosaic internal scratch/spills

    if row_tile is None:
        # Generation-aware default: big row tiles keep large-M FFNs MXU-bound
        # (v6e ridge ~640 flop/byte); v7x has only 64 MiB VMEM per core.
        row_tile = 1024 if vmem_cap >= (96 << 20) else 512

    tm, tf, n_f, resident = _select_config(
        M, C, F, x_bytes, w_bytes, o_bytes, budget,
        row_tile=row_tile, max_f_tile=max_f_tile,
        force_f_tiling=force_f_tiling)

    # Ragged last row tile: no wrapper pad/slice, Pallas masks the OOB rows
    # (rows are independent, so garbage rows never touch valid output).
    n_rows = _cdiv(M, tm)

    if resident:
        est = _vmem_bytes_resident(tm, C, F, x_bytes, w_bytes, o_bytes)
    else:
        est = _vmem_bytes_tiled(tm, tf, C, x_bytes, w_bytes, o_bytes)
    vmem_limit = int(min(max(est + (4 << 20), 32 << 20), vmem_cap))

    if resident:
        grid_spec = pltpu.PrefetchScalarGridSpec(
            num_scalar_prefetch=0,
            grid=(n_rows,),
            in_specs=[
                pl.BlockSpec((tm, C), lambda i: (i, 0)),   # x row tile
                _const_spec((C, F), lambda i: (0, 0)),     # W1 (resident)
                _const_spec((1, F), lambda i: (0, 0)),     # b1 (resident)
                _const_spec((F, C), lambda i: (0, 0)),     # W2 (resident)
                _const_spec((1, C), lambda i: (0, 0)),     # b2 (resident)
            ],
            out_specs=pl.BlockSpec((tm, C), lambda i: (i, 0)),
        )
        kernel = _ffn_kernel_resident
        dim_sem = ("parallel",)
    else:
        fp = tf * n_f
        if fp != F:
            # Zero-pad the hidden dim so tf | fp; padded W1 columns / W2 rows
            # are zero, so they contribute exactly zero to the output.
            w1 = jnp.pad(w1, ((0, 0), (0, fp - F)))
            b1_2d = jnp.pad(b1_2d, ((0, 0), (0, fp - F)))
            w2 = jnp.pad(w2, ((0, fp - F), (0, 0)))
        grid_spec = pltpu.PrefetchScalarGridSpec(
            num_scalar_prefetch=0,
            grid=(n_rows, n_f),
            in_specs=[
                pl.BlockSpec((tm, C), lambda i, f: (i, 0)),   # x row tile
                pl.BlockSpec((C, tf), lambda i, f: (0, f)),   # W1 column tile
                pl.BlockSpec((1, tf), lambda i, f: (0, f)),   # b1 tile
                pl.BlockSpec((tf, C), lambda i, f: (f, 0)),   # W2 row tile
                _const_spec((1, C), lambda i, f: (0, 0)),     # b2 (tiny, const)
            ],
            out_specs=pl.BlockSpec((tm, C), lambda i, f: (i, 0)),
            scratch_shapes=[pltpu.VMEM((tm, C), jnp.float32)],
        )
        kernel = _ffn_kernel_tiled
        dim_sem = ("parallel", "arbitrary")

    out2d = pl.pallas_call(
        kernel,
        out_shape=jax.ShapeDtypeStruct((M, C), out_dtype),
        grid_spec=grid_spec,
        compiler_params=pltpu.CompilerParams(
            dimension_semantics=dim_sem,
            vmem_limit_bytes=vmem_limit),
    )(x2d, w1, b1_2d, w2, b2_2d)

    return out2d.reshape(orig_shape)


# ------------------------------ reference ------------------------------------

def _reference_ffn(x, w1, b1, w2, b2):
    """Pure-JAX f32 reference (exact erf GELU)."""
    x = x.astype(jnp.float32)
    h = jnp.dot(x, w1.astype(jnp.float32)) + b1.astype(jnp.float32)
    h = 0.5 * h * (1.0 + lax.erf(h * _INV_SQRT2))
    return jnp.dot(h, w2.astype(jnp.float32)) + b2.astype(jnp.float32)


def _make_params(key, in_features, ffn_features, dtype):
    kw1, kb1, kw2, kb2 = jax.random.split(key, 4)
    bound1 = 1.0 / math.sqrt(in_features)
    w1 = jax.random.uniform(kw1, (in_features, ffn_features),
                            minval=-bound1, maxval=bound1, dtype=jnp.float32)
    b1 = jax.random.uniform(kb1, (ffn_features,),
                            minval=-bound1, maxval=bound1, dtype=jnp.float32)
    bound2 = 1.0 / math.sqrt(ffn_features)
    w2 = jax.random.uniform(kw2, (ffn_features, in_features),
                            minval=-bound2, maxval=bound2, dtype=jnp.float32)
    b2 = jax.random.uniform(kb2, (in_features,),
                            minval=-bound2, maxval=bound2, dtype=jnp.float32)
    return (w1.astype(dtype), b1.astype(dtype),
            w2.astype(dtype), b2.astype(dtype))


if __name__ == "__main__":
    key = jax.random.PRNGKey(0)
    k0, k1, k2, k3 = jax.random.split(key, 4)

    # --- Test 1: f32, small shapes, weight-resident path (single grid step).
    batch, seq, C, F = 2, 8, 32, 64
    x = jax.random.normal(k0, (batch, seq, C), dtype=jnp.float32)
    w1, b1, w2, b2 = _make_params(k1, C, F, jnp.float32)
    out = jax.block_until_ready(position_wise_ffn(x, w1, b1, w2, b2))
    ref = _reference_ffn(x, w1, b1, w2, b2)
    assert out.shape == x.shape
    assert jnp.allclose(out, ref, atol=1e-5, rtol=1e-5), "f32 mismatch"

    # --- Test 2: bf16 fast path (bf16 operands, f32 accumulation).
    xb = x.astype(jnp.bfloat16)
    w1b, b1b, w2b, b2b = (w1.astype(jnp.bfloat16), b1.astype(jnp.bfloat16),
                          w2.astype(jnp.bfloat16), b2.astype(jnp.bfloat16))
    outb = jax.block_until_ready(position_wise_ffn(xb, w1b, b1b, w2b, b2b))
    refb = _reference_ffn(xb, w1b, b1b, w2b, b2b)
    assert outb.dtype == jnp.bfloat16
    assert jnp.allclose(outb.astype(jnp.float32), refb,
                        atol=3e-2, rtol=3e-2), "bf16 mismatch"

    # --- Test 3: ragged row grid (M % tm != 0) on the resident path, no pad.
    batch3, seq3, C3, F3 = 2, 24, 128, 256      # M = 48, tm = 32 -> ragged tile
    x3 = jax.random.normal(k2, (batch3, seq3, C3), dtype=jnp.float32)
    w13, b13, w23, b23 = _make_params(k1, C3, F3, jnp.float32)
    out3 = jax.block_until_ready(
        position_wise_ffn(x3, w13, b13, w23, b23, row_tile=32))
    ref3 = _reference_ffn(x3, w13, b13, w23, b23)
    assert out3.shape == x3.shape
    assert jnp.allclose(out3, ref3, atol=1e-4, rtol=1e-4), "ragged-row mismatch"

    # --- Test 4: forced F-tiled reduction path with hidden-dim zero padding
    #             (F = 320 is not a multiple of the 128 tile quantum).
    C4, F4 = 128, 320
    x4 = jax.random.normal(k3, (2, 24, C4), dtype=jnp.float32)
    w14, b14, w24, b24 = _make_params(k1, C4, F4, jnp.float32)
    out4 = jax.block_until_ready(
        position_wise_ffn(x4, w14, b14, w24, b24, row_tile=32, max_f_tile=128,
                          force_f_tiling=True))
    ref4 = _reference_ffn(x4, w14, b14, w24, b24)
    assert jnp.allclose(out4, ref4, atol=1e-4, rtol=1e-4), "f-tiled mismatch"

    # --- Test 5: optional bf16 compute path for f32 parameters (v5e advice).
    out5 = jax.block_until_ready(
        position_wise_ffn(x, w1, b1, w2, b2, weight_compute_dtype=jnp.bfloat16))
    assert out5.dtype == x.dtype
    assert jnp.allclose(out5, ref, atol=5e-2, rtol=5e-2), "bf16-compute mismatch"

    print("KERNEL_OK")
</pallas_src>

<mosaic_0001>
module attributes {stable_mosaic.version = 11 : i64} {
  func.func @_ffn_kernel_resident(%arg0: i32, %arg1: memref<16x32xf32, #tpu.memory_space<vmem>>, %arg2: memref<32x64xf32, #tpu.memory_space<vmem>>, %arg3: memref<1x64xf32, #tpu.memory_space<vmem>>, %arg4: memref<64x32xf32, #tpu.memory_space<vmem>>, %arg5: memref<1x32xf32, #tpu.memory_space<vmem>>, %arg6: memref<16x32xf32, #tpu.memory_space<vmem>>) attributes {dimension_semantics = [#tpu.dimension_semantics<parallel>], iteration_bounds = array<i64: 1>, scalar_prefetch = 0 : i64, scratch_operands = 0 : i64, tpu.core_type = #tpu.core_type<tc>, window_params = [{transform_indices = @transform_0, window_bounds = array<i64: 16, 32>}, {pipeline_mode = #tpu.pipeline_mode<synchronous>, transform_indices = @transform_1, window_bounds = array<i64: 32, 64>}, {pipeline_mode = #tpu.pipeline_mode<synchronous>, transform_indices = @transform_2, window_bounds = array<i64: 1, 64>}, {pipeline_mode = #tpu.pipeline_mode<synchronous>, transform_indices = @transform_3, window_bounds = array<i64: 64, 32>}, {pipeline_mode = #tpu.pipeline_mode<synchronous>, transform_indices = @transform_4, window_bounds = array<i64: 1, 32>}, {transform_indices = @transform_5, window_bounds = array<i64: 16, 32>}]} {
    %c0 = arith.constant 0 : index
    %c0_0 = arith.constant 0 : index
    %0 = vector.load %arg1[%c0, %c0_0] : memref<16x32xf32, #tpu.memory_space<vmem>>, vector<16x32xf32>
    %c0_1 = arith.constant 0 : index
    %c0_2 = arith.constant 0 : index
    %1 = vector.load %arg2[%c0_1, %c0_2] : memref<32x64xf32, #tpu.memory_space<vmem>>, vector<32x64xf32>
    %cst = arith.constant dense<0.000000e+00> : vector<16x64xf32>
    %2 = tpu.matmul %0, %1, %cst {dimension_numbers = #tpu.dot_dimension_numbers<[1], [0], [0], [1], [0, 0, 1, 1], [], []>} : vector<16x32xf32>, vector<32x64xf32>, vector<16x64xf32> -> vector<16x64xf32>
    %c0_3 = arith.constant 0 : index
    %c0_4 = arith.constant 0 : index
    %3 = vector.load %arg3[%c0_3, %c0_4] : memref<1x64xf32, #tpu.memory_space<vmem>>, vector<1x64xf32>
    %4 = vector.broadcast %3 : vector<1x64xf32> to vector<16x64xf32>
    %5 = arith.addf %2, %4 : vector<16x64xf32>
    %cst_5 = arith.constant 5.000000e-01 : f32
    %6 = vector.broadcast %cst_5 : f32 to vector<16x64xf32>
    %7 = arith.mulf %6, %5 : vector<16x64xf32>
    %cst_6 = arith.constant 0.707106769 : f32
    %8 = vector.broadcast %cst_6 : f32 to vector<16x64xf32>
    %9 = arith.mulf %5, %8 : vector<16x64xf32>
    %10 = math.erf %9 : vector<16x64xf32>
    %cst_7 = arith.constant 1.000000e+00 : f32
    %11 = vector.broadcast %cst_7 : f32 to vector<16x64xf32>
    %12 = arith.addf %11, %10 : vector<16x64xf32>
    %13 = arith.mulf %7, %12 : vector<16x64xf32>
    %c0_8 = arith.constant 0 : index
    %c0_9 = arith.constant 0 : index
    %14 = vector.load %arg4[%c0_8, %c0_9] : memref<64x32xf32, #tpu.memory_space<vmem>>, vector<64x32xf32>
    %cst_10 = arith.constant dense<0.000000e+00> : vector<16x32xf32>
    %15 = tpu.matmul %13, %14, %cst_10 {dimension_numbers = #tpu.dot_dimension_numbers<[1], [0], [0], [1], [0, 0, 1, 1], [], []>} : vector<16x64xf32>, vector<64x32xf32>, vector<16x32xf32> -> vector<16x32xf32>
    %c0_11 = arith.constant 0 : index
    %c0_12 = arith.constant 0 : index
    %16 = vector.load %arg5[%c0_11, %c0_12] : memref<1x32xf32, #tpu.memory_space<vmem>>, vector<1x32xf32>
    %17 = vector.broadcast %16 : vector<1x32xf32> to vector<16x32xf32>
    %18 = arith.addf %15, %17 : vector<16x32xf32>
    %c0_13 = arith.constant 0 : index
    %c0_14 = arith.constant 0 : index
    %19 = vector.load %arg6[%c0_13, %c0_14] : memref<16x32xf32, #tpu.memory_space<vmem>>, vector<16x32xf32>
    tpu.vector_store %arg6[%c0_13, %c0_14], %18 {strides = array<i32>} : memref<16x32xf32, #tpu.memory_space<vmem>>, vector<16x32xf32>,
    return
  }
  func.func @transform_0(%arg0: i32) -> (i32, i32) {
    %c0_i32 = arith.constant 0 : i32
    %c0_i32_0 = arith.constant 0 : i32
    return %arg0, %c0_i32 : i32, i32
  }
  func.func @transform_1(%arg0: i32) -> (i32, i32) {
    %c0_i32 = arith.constant 0 : i32
    %c0_i32_0 = arith.constant 0 : i32
    %c0_i32_1 = arith.constant 0 : i32
    return %c0_i32, %c0_i32_0 : i32, i32
  }
  func.func @transform_2(%arg0: i32) -> (i32, i32) {
    %c0_i32 = arith.constant 0 : i32
    %c0_i32_0 = arith.constant 0 : i32
    %c0_i32_1 = arith.constant 0 : i32
    return %c0_i32, %c0_i32_0 : i32, i32
  }
  func.func @transform_3(%arg0: i32) -> (i32, i32) {
    %c0_i32 = arith.constant 0 : i32
    %c0_i32_0 = arith.constant 0 : i32
    %c0_i32_1 = arith.constant 0 : i32
    return %c0_i32, %c0_i32_0 : i32, i32
  }
  func.func @transform_4(%arg0: i32) -> (i32, i32) {
    %c0_i32 = arith.constant 0 : i32
    %c0_i32_0 = arith.constant 0 : i32
    %c0_i32_1 = arith.constant 0 : i32
    return %c0_i32, %c0_i32_0 : i32, i32
  }
  func.func @transform_5(%arg0: i32) -> (i32, i32) {
    %c0_i32 = arith.constant 0 : i32
    %c0_i32_0 = arith.constant 0 : i32
    return %arg0, %c0_i32 : i32, i32
  }
}

</mosaic_0001>

<llo_original>
// kernel: position_wise_ffn.1
$region0: #{position_wise_ffn.1}
  #allocation0 [shape = 'u32[]', space=smem, size = 0x4, offset = 0x4, fixed_abs, tag = 'smem constant byte address 0x4 - core index']
  #allocation1 [shape = 'u32[72,128]{1,0:T(1,128)}', space=vmem, size = 0x9000, scoped, tag = 'internal scratch']
  %s0 = inlined_call_operand.vmem [shape: f32[16,32], index: 0, kind: input, shape index: {}]
  %s1 = inlined_call_operand.vmem [shape: f32[32,64], index: 1, kind: input, shape index: {}]
  %s2 = inlined_call_operand.vmem [shape: f32[1,64], index: 2, kind: input, shape index: {}]
  %s3 = inlined_call_operand.vmem [shape: f32[64,32], index: 3, kind: input, shape index: {}]
  %s4 = inlined_call_operand.vmem [shape: f32[1,32], index: 4, kind: input, shape index: {}]
  %s5 = inlined_call_operand.hbm [shape: f32[16,32], index: 5, kind: output, shape index: {}]
  %s6 = sld [smem:[#allocation0]]
  $region30: #{position_wise_ffn.1} parent=0
    _
  %s8 = ssub.s32 1, %s6
  %s9 = scalar_select 0, %s8, %s6
  $region1: #{position_wise_ffn.1} parent=0
    #allocation2 [shape = 'u8[8192]{0}', space=vmem, size = 0x2000, scoped, tag = 'output window, operand 0, single buffered']
    #allocation3 [shape = 's32[1]{0}', space=sflag, size = 0x4, scoped, tag = 'scoped memory for position_wise_ffn.1']
    %10 = vsyncpa [#allocation3], 0
    // Predicated region
    $region2: #{position_wise_ffn.1} parent=1 // pred_check
      _
    $region3: #{position_wise_ffn.1} parent=1 // pred_check_branch
      %12 = sbr.rel (0) target = $region5
    $region4: #{position_wise_ffn.1} parent=1 // pred_region
      _
    $region5: #{position_wise_ffn.1} parent=1 // pred_fallthru
      _
    // Predicated region
    $region6: #{position_wise_ffn.1} parent=1 // pred_check
      _
    $region7: #{position_wise_ffn.1} parent=1 // pred_check_branch
      %14 = sbr.rel (0) target = $region9
    $region8: #{position_wise_ffn.1} parent=1 // pred_region
      _
    $region9: #{position_wise_ffn.1} parent=1 // pred_fallthru
      _
    // Predicated region
    $region10: #{position_wise_ffn.1} parent=1 // pred_check
      _
    $region11: #{position_wise_ffn.1} parent=1 // pred_check_branch
      %16 = sbr.rel (0) target = $region13
    $region12: #{position_wise_ffn.1} parent=1 // pred_region
      _
    $region13: #{position_wise_ffn.1} parent=1 // pred_fallthru
      _
    // Predicated region
    $region14: #{position_wise_ffn.1} parent=1 // pred_check
      _
    $region15: #{position_wise_ffn.1} parent=1 // pred_check_branch
      %18 = sbr.rel (0) target = $region17
    $region16: #{position_wise_ffn.1} parent=1 // pred_region
      _
    $region17: #{position_wise_ffn.1} parent=1 // pred_fallthru
      _
    // Predicated region
    $region18: #{position_wise_ffn.1} parent=1 // pred_check
      _
    $region19: #{position_wise_ffn.1} parent=1 // pred_check_branch
      %20 = sbr.rel (0) target = $region21
    $region20: #{position_wise_ffn.1} parent=1 // pred_region
      _
    $region21: #{position_wise_ffn.1} parent=1 // pred_fallthru
      _
    %v21 = vld [vmem:[%s0] sm:$0xff]
    %v22 = vld [vmem:[%s0 + $0x8] sm:$0xff]
    %v23 = vld [vmem:[%s1] sm:$0xff]
    %v24 = vld [vmem:[%s1 + $0x8] sm:$0xff]
    %v25 = vld [vmem:[%s1 + $0x10] sm:$0xff]
    %v26 = vld [vmem:[%s1 + $0x18] sm:$0xff]
    %v27 = vld [vmem:[%s2] sm:$0x1]
    %v29 = vperm.slane %v27, 0
    %vm31 = vcmask 261120
    %v33 = vsel %vm31, %v21, 0
    %v36 = vsel %vm31, %v22, 0
    %38 = vmatpush.msra.mxu0 0.0
    %39 = vmatpush.msra.mxu0 0.0
    %40 = vmatpush.msra.mxu0 0.0
    %41 = vmatpush.msra.mxu0 0.0
    %42 = vmatpush.msra.mxu0 0.0
    %43 = vmatpush.msra.mxu0 0.0
    %44 = vmatpush.msra.mxu0 0.0
    %45 = vmatpush.msra.mxu0 0.0
    %46 = vmatpush.msra.mxu0 0.0
    %47 = vmatpush.msra.mxu0 0.0
    %48 = vmatpush.msra.mxu0 0.0
    %49 = vmatpush.msra.mxu0 0.0
    %50 = vmatpush.msra.mxu0 %v26
    %51 = vmatpush.msra.mxu0 %v25
    %52 = vmatpush.msra.mxu0 %v24
    %53 = vmatpush.msra.mxu0 %v23
    %54 = vmatmul.f32.gmra.mxu0 %v33
    %v55 = vpop.f32.mrf.mxu0
    %v56 = vadd.f32 %v29, %v55
    %57 = vmatmul.f32.gmra.mxu0 %v36
    %v58 = vpop.f32.mrf.mxu0
    %v59 = vadd.f32 %v29, %v58
    %60 = vdwg.mxu0
    %v61 = vmul.f32 %v56, 0.5
    %v62 = vmul.f32 %v59, 0.5
    %v63 = vmul.f32 %v56, 0.70710677
    %v64 = vmul.f32 %v59, 0.70710677
    %v65 = vmul.f32 %v63, %v63
    %v66 = vmin.f32 16.0, %v65
    %v67 = vmul.f32 %v66, 2.1237322e-06
    %v68 = vadd.f32 %v67, 0.00028619796
    %v69 = vmul.f32 %v66, %v68
    %v70 = vadd.f32 %v69, 0.0036580483
    %v71 = vmul.f32 %v66, %v70
    %v72 = vadd.f32 %v71, 0.05243302
    %v73 = vmul.f32 %v66, %v72
    %v74 = vadd.f32 %v73, 0.18741608
    %v75 = vmul.f32 %v66, %v74
    %v76 = vadd.f32 %v75, 1.1283791
    %v77 = vmul.f32 %v63, %v76
    %v78 = vmul.f32 %v66, 3.8918573e-05
    %v79 = vadd.f32 %v78, 0.001143296
    %v80 = vmul.f32 %v66, %v79
    %v81 = vadd.f32 %v80, 0.014752088
    %v82 = vmul.f32 %v66, %v81
    %v83 = vadd.f32 %v82, 0.112945676
    %v84 = vmul.f32 %v66, %v83
    %v85 = vadd.f32 %v84, 0.4994258
    %v86 = vmul.f32 %v66, %v85
    %v87 = vadd.f32 %v86, 1.0
    %v88 = vrcp.pop %v87
    %v89 = vmul.f32 %v87, %v88
    %v90 = vsub.f32 1.0, %v89
    %v91 = vmul.f32 %v88, %v90
    %v92 = vadd.f32 %v88, %v91
    %vm93 = vweird.f32 %v87
    %vm94 = vweird.f32 %v88
    %vm95 = vmor %vm93, %vm94
    %v96 = vsel %vm95, %v88, %v92
    %v97 = vand.u32 2147483647, %v87
    %vm98 = vcmp.eq.f32.partialorder %v97, 8.507059e+37
    %v99 = vand.u32 %v87, 2147483648
    %v100 = vor.u32 1.1754944e-38, %v99
    %v101 = vsel %vm98, %v100, %v96
    %v102 = vmul.f32 %v77, %v101
    %v103 = vmin.f32 %v102, 1.0
    %v104 = vmax.f32 %v103, -1.0
    %v105 = vmul.f32 %v64, %v64
    %v106 = vmin.f32 16.0, %v105
    %v107 = vmul.f32 %v106, 2.1237322e-06
    %v108 = vadd.f32 %v107, 0.00028619796
    %v109 = vmul.f32 %v106, %v108
    %v110 = vadd.f32 %v109, 0.0036580483
    %v111 = vmul.f32 %v106, %v110
    %v112 = vadd.f32 %v111, 0.05243302
    %v113 = vmul.f32 %v106, %v112
    %v114 = vadd.f32 %v113, 0.18741608
    %v115 = vmul.f32 %v106, %v114
    %v116 = vadd.f32 %v115, 1.1283791
    %v117 = vmul.f32 %v64, %v116
    %v118 = vmul.f32 %v106, 3.8918573e-05
    %v119 = vadd.f32 %v118, 0.001143296
    %v120 = vmul.f32 %v106, %v119
    %v121 = vadd.f32 %v120, 0.014752088
    %v122 = vmul.f32 %v106, %v121
    %v123 = vadd.f32 %v122, 0.112945676
    %v124 = vmul.f32 %v106, %v123
    %v125 = vadd.f32 %v124, 0.4994258
    %v126 = vmul.f32 %v106, %v125
    %v127 = vadd.f32 %v126, 1.0
    %v128 = vrcp.pop %v127
    %v129 = vmul.f32 %v127, %v128
    %v130 = vsub.f32 1.0, %v129
    %v131 = vmul.f32 %v128, %v130
    %v132 = vadd.f32 %v128, %v131
    %vm133 = vweird.f32 %v127
    %vm134 = vweird.f32 %v128
    %vm135 = vmor %vm133, %vm134
    %v136 = vsel %vm135, %v128, %v132
    %v137 = vand.u32 2147483647, %v127
    %vm138 = vcmp.eq.f32.partialorder %v137, 8.507059e+37
    %v139 = vand.u32 %v127, 2147483648
    %v140 = vor.u32 1.1754944e-38, %v139
    %v141 = vsel %vm138, %v140, %v136
    %v142 = vmul.f32 %v117, %v141
    %v143 = vmin.f32 %v142, 1.0
    %v144 = vmax.f32 %v143, -1.0
    %v145 = vadd.f32 %v104, 1.0
    %v146 = vadd.f32 %v144, 1.0
    %v147 = vmul.f32 %v61, %v145
    %v148 = vmul.f32 %v62, %v146
    %v149 = vld [vmem:[%s3] sm:$0xff]
    %v150 = vld [vmem:[%s3 + $0x8] sm:$0xff]
    %v151 = vld [vmem:[%s3 + $0x10] sm:$0xff]
    %v152 = vld [vmem:[%s3 + $0x18] sm:$0xff]
    %v153 = vld [vmem:[%s3 + $0x20] sm:$0xff]
    %v154 = vld [vmem:[%s3 + $0x28] sm:$0xff]
    %v155 = vld [vmem:[%s3 + $0x30] sm:$0xff]
    %v156 = vld [vmem:[%s3 + $0x38] sm:$0xff]
    %v157 = vld [vmem:[%s4] sm:$0x1]
    %v159 = vperm.slane %v157, 0
    %vm161 = vcmask 523264
    %v163 = vsel %vm161, %v147, 0
    %v166 = vsel %vm161, %v148, 0
    %168 = vmatpush.msra.mxu0 0.0
    %169 = vmatpush.msra.mxu0 0.0
    %170 = vmatpush.msra.mxu0 0.0
    %171 = vmatpush.msra.mxu0 0.0
    %172 = vmatpush.msra.mxu0 0.0
    %173 = vmatpush.msra.mxu0 0.0
    %174 = vmatpush.msra.mxu0 0.0
    %175 = vmatpush.msra.mxu0 0.0
    %176 = vmatpush.msra.mxu0 %v156
    %177 = vmatpush.msra.mxu0 %v155
    %178 = vmatpush.msra.mxu0 %v154
    %179 = vmatpush.msra.mxu0 %v153
    %180 = vmatpush.msra.mxu0 %v152
    %181 = vmatpush.msra.mxu0 %v151
    %182 = vmatpush.msra.mxu0 %v150
    %183 = vmatpush.msra.mxu0 %v149
    %184 = vmatmul.f32.gmra.mxu0 %v163
    %v185 = vpop.f32.mrf.mxu0
    %v186 = vadd.f32 %v159, %v185
    %187 = vmatmul.f32.gmra.mxu0 %v166
    %v188 = vpop.f32.mrf.mxu0
    %v189 = vadd.f32 %v159, %v188
    %190 = vdwg.mxu0
    %191 = vst.msk [vmem:[#allocation2] sm:$0xff] %vm31, %v186
    %192 = vst.msk [vmem:[#allocation2 + $0x8] sm:$0xff] %vm31, %v189
    // Predicated region
    $region22: #{position_wise_ffn.1} parent=1 // pred_check
      _
    $region23: #{position_wise_ffn.1} parent=1 // pred_check_branch
      %194 = sbr.rel (0) target = $region25
    $region24: #{position_wise_ffn.1} parent=1 // pred_region
      %196 = vsyncadd [#allocation3], 0
      %s197 = sshll.u32 [#allocation2], 4
      %s198 = int_to_ptr.vmem [resolvable:$true] %s197
      %s199 = sshll.u32 %s5, 4
      %s200 = int_to_ptr.hbm [resolvable:$true] %s199
      %205 = dma.vmem_to_hbm [thread:$0]  %s198, 256, %s200, [#allocation3], 128, 128, 8
    $region25: #{position_wise_ffn.1} parent=1 // pred_fallthru
      _
    // Predicated region
    $region26: #{position_wise_ffn.1} parent=1 // pred_check
      _
    $region27: #{position_wise_ffn.1} parent=1 // pred_check_branch
      %207 = sbr.rel (0) target = $region29
    $region28: #{position_wise_ffn.1} parent=1 // pred_region
      %209 = dma.done [#allocation3], 256
    $region29: #{position_wise_ffn.1} parent=1 // pred_fallthru
      _
    %210 = vsyncpa [#allocation3], 1

</llo_original>
